<compile_context>
chip_gen: v7x
topology: tpu7x:2x2x1
jax: 0.10.0
libtpu: 0.0.40
codegen_flags: <defaults>
</compile_context>

<pallas_src>
import jax
import jax.numpy as jnp
from jax.experimental import pallas as pl
from jax.experimental.pallas import tpu as pltpu

_LANE = 128


def _denorm_kernel(scale_ref, shift_ref, x_ref, o_ref):
    # scale_ref / shift_ref: full (C,) f32 vectors resident in SMEM.
    # x_ref / o_ref: one VMEM tile; grid axis 0 is the channel index.
    c = pl.program_id(0)
    s = scale_ref[c]
    m = shift_ref[c]
    # f32 math for exact parity with the PyTorch module (f32 mean/std buffers).
    o_ref[...] = (x_ref[...] * s + m).astype(o_ref.dtype)


def _sublane_multiple(dtype):
    itemsize = jnp.dtype(dtype).itemsize
    return {4: 8, 2: 16, 1: 32}.get(itemsize, 8)


def denormalize_video(x, mean, std):
    """x * std[c] + mean[c], broadcast over (T, H, W). x is (C, T, H, W)."""
    C, T, H, W = x.shape
    assert mean.shape == (C,) and std.shape == (C,)

    N = T * H * W
    itemsize = jnp.dtype(x.dtype).itemsize

    scale = std.astype(jnp.float32)
    shift = mean.astype(jnp.float32)

    cost = pl.CostEstimate(
        flops=2 * C * N,
        transcendentals=0,
        bytes_accessed=2 * C * N * itemsize,
    )
    cparams = pltpu.CompilerParams(
        dimension_semantics=("parallel", "parallel"),
        vmem_limit_bytes=32 << 20,
    )

    if N % _LANE == 0:
        # ---- lane-dense fast path: (C, T, H, W) -> (C, M, 128), no copy ----
        M = N // _LANE
        x3 = x.reshape(C, M, _LANE)

        sub = _sublane_multiple(x.dtype)
        rows_4mib = (4 << 20) // (_LANE * itemsize)  # ~4 MiB per block buffer
        n_j = pl.cdiv(M, rows_4mib)
        # Keep >= 8 total grid steps when the tensor is big enough, so both
        # v7x TensorCores get balanced work (extra steps cost only ~0.35 us).
        if C * n_j < 8:
            n_j = min(pl.cdiv(8, C), pl.cdiv(M, sub))
        mb = pl.cdiv(pl.cdiv(M, n_j), sub) * sub  # dtype-aware sublane rounding
        if mb >= M:
            mb = M  # the full dim is always a legal block size

        out3 = pl.pallas_call(
            _denorm_kernel,
            out_shape=jax.ShapeDtypeStruct((C, M, _LANE), x.dtype),
            grid_spec=pl.GridSpec(
                grid=(C, pl.cdiv(M, mb)),
                in_specs=[
                    pl.BlockSpec(memory_space=pltpu.MemorySpace.SMEM),
                    pl.BlockSpec(memory_space=pltpu.MemorySpace.SMEM),
                    pl.BlockSpec((1, mb, _LANE), lambda c, j: (c, j, 0)),
                ],
                out_specs=pl.BlockSpec((1, mb, _LANE), lambda c, j: (c, j, 0)),
            ),
            compiler_params=cparams,
            cost_estimate=cost,
        )(scale, shift, x3)
        return out3.reshape(C, T, H, W)

    # ---- ragged path (T*H*W not a multiple of 128) ----
    # Block whole (H, W) planes of the original layout: no pad, no output
    # slice, no extra HBM passes. Lanes are only partially dense if W is
    # small, but that is still far cheaper than the 2 extra full HBM passes
    # a pad + slice fallback would cost.
    w_pad = pl.cdiv(W, _LANE) * _LANE  # lane padding drives real VMEM use
    tb = max(1, (4 << 20) // max(1, H * w_pad * itemsize))
    tb = min(tb, T)
    # TODO(synk): a single ragged frame larger than ~8 MiB (padded) would
    # exceed the 32 MiB pipeline budget; not expected for video inputs.

    out = pl.pallas_call(
        _denorm_kernel,
        out_shape=jax.ShapeDtypeStruct((C, T, H, W), x.dtype),
        grid_spec=pl.GridSpec(
            grid=(C, pl.cdiv(T, tb)),
            in_specs=[
                pl.BlockSpec(memory_space=pltpu.MemorySpace.SMEM),
                pl.BlockSpec(memory_space=pltpu.MemorySpace.SMEM),
                pl.BlockSpec((1, tb, H, W), lambda c, j: (c, j, 0, 0)),
            ],
            out_specs=pl.BlockSpec((1, tb, H, W), lambda c, j: (c, j, 0, 0)),
        ),
        compiler_params=cparams,
        cost_estimate=cost,
    )(scale, shift, x)
    return out


if __name__ == "__main__":
    key = jax.random.PRNGKey(0)
    k1, k2 = jax.random.split(key)

    # --- fast (lane-aligned) path: C=4 channels, T=4 frames, 16x16 spatial ---
    C, T, H, W = 4, 4, 16, 16
    x = jax.random.normal(k1, (C, T, H, W), dtype=jnp.float32)
    mean = jnp.array([0.45, 0.40, 0.35, 0.30], dtype=jnp.float32)
    std = jnp.array([0.225, 0.250, 0.275, 0.300], dtype=jnp.float32)

    out = jax.block_until_ready(denormalize_video(x, mean, std))
    ref = x * std[:, None, None, None] + mean[:, None, None, None]
    assert out.shape == x.shape and out.dtype == x.dtype
    assert jnp.allclose(out, ref, atol=1e-5, rtol=1e-5)

    # --- ragged path: T*H*W not a multiple of 128 (no pad/slice fallback) ---
    C2, T2, H2, W2 = 3, 2, 10, 12
    x2 = jax.random.normal(k2, (C2, T2, H2, W2), dtype=jnp.float32)
    mean2 = jnp.array([0.5, 0.4, 0.3], dtype=jnp.float32)
    std2 = jnp.array([0.2, 0.25, 0.3], dtype=jnp.float32)

    out2 = jax.block_until_ready(denormalize_video(x2, mean2, std2))
    ref2 = x2 * std2[:, None, None, None] + mean2[:, None, None, None]
    assert out2.shape == x2.shape and out2.dtype == x2.dtype
    assert jnp.allclose(out2, ref2, atol=1e-5, rtol=1e-5)

    print("KERNEL_OK")
</pallas_src>

<mosaic_0001>
module attributes {stable_mosaic.version = 11 : i64} {
  func.func @_denorm_kernel(%arg0: i32, %arg1: i32, %arg2: memref<4xf32, #tpu.memory_space<smem>>, %arg3: memref<4xf32, #tpu.memory_space<smem>>, %arg4: memref<1x8x128xf32, #tpu.memory_space<vmem>>, %arg5: memref<1x8x128xf32, #tpu.memory_space<vmem>>) attributes {dimension_semantics = [#tpu.dimension_semantics<parallel>, #tpu.dimension_semantics<parallel>], iteration_bounds = array<i64: 4, 1>, scalar_prefetch = 0 : i64, scratch_operands = 0 : i64, tpu.core_type = #tpu.core_type<tc>, window_params = [{transform_indices = @transform_0, window_bounds = array<i64: 4>}, {transform_indices = @transform_1, window_bounds = array<i64: 4>}, {transform_indices = @transform_2, window_bounds = array<i64: 1, 8, 128>}, {transform_indices = @transform_3, window_bounds = array<i64: 1, 8, 128>}]} {
    %0 = arith.index_cast %arg0 : i32 to index
    %1 = memref.load %arg2[%0] : memref<4xf32, #tpu.memory_space<smem>>
    %2 = arith.index_cast %arg0 : i32 to index
    %3 = memref.load %arg3[%2] : memref<4xf32, #tpu.memory_space<smem>>
    %c0 = arith.constant 0 : index
    %c0_0 = arith.constant 0 : index
    %c0_1 = arith.constant 0 : index
    %4 = vector.load %arg4[%c0, %c0_0, %c0_1] : memref<1x8x128xf32, #tpu.memory_space<vmem>>, vector<1x8x128xf32>
    %5 = vector.broadcast %1 : f32 to vector<1x8x128xf32>
    %6 = arith.mulf %4, %5 : vector<1x8x128xf32>
    %7 = vector.broadcast %3 : f32 to vector<1x8x128xf32>
    %8 = arith.addf %6, %7 : vector<1x8x128xf32>
    %c0_2 = arith.constant 0 : index
    %c0_3 = arith.constant 0 : index
    %c0_4 = arith.constant 0 : index
    %9 = vector.load %arg5[%c0_2, %c0_3, %c0_4] : memref<1x8x128xf32, #tpu.memory_space<vmem>>, vector<1x8x128xf32>
    tpu.vector_store %arg5[%c0_2, %c0_3, %c0_4], %8 {strides = array<i32>} : memref<1x8x128xf32, #tpu.memory_space<vmem>>, vector<1x8x128xf32>,
    return
  }
  func.func @transform_0(%arg0: i32, %arg1: i32) -> i32 {
    %c0_i32 = arith.constant 0 : i32
    %c0_i32_0 = arith.constant 0 : i32
    return %c0_i32 : i32
  }
  func.func @transform_1(%arg0: i32, %arg1: i32) -> i32 {
    %c0_i32 = arith.constant 0 : i32
    %c0_i32_0 = arith.constant 0 : i32
    return %c0_i32 : i32
  }
  func.func @transform_2(%arg0: i32, %arg1: i32) -> (i32, i32, i32) {
    %c0_i32 = arith.constant 0 : i32
    %c0_i32_0 = arith.constant 0 : i32
    return %arg0, %arg1, %c0_i32 : i32, i32, i32
  }
  func.func @transform_3(%arg0: i32, %arg1: i32) -> (i32, i32, i32) {
    %c0_i32 = arith.constant 0 : i32
    %c0_i32_0 = arith.constant 0 : i32
    return %arg0, %arg1, %c0_i32 : i32, i32, i32
  }
}

</mosaic_0001>

<llo_original>
// kernel: tpu_custom_call.1
$region0: #{tpu_custom_call.1}
  #allocation0 [shape = 'u32[]', space=smem, size = 0x4, offset = 0x4, fixed_abs, tag = 'smem constant byte address 0x4 - core index']
  #allocation1 [shape = 'u32[144,128]{1,0:T(1,128)}', space=vmem, size = 0x12000, scoped, tag = 'internal scratch']
  %s0 = inlined_call_operand.hbm [shape: f32[4], index: 0, kind: input, shape index: {}]
  %s1 = inlined_call_operand.vmem [shape: f32[4], index: 1, kind: input, shape index: {}]
  %s2 = inlined_call_operand.hbm [shape: f32[4,8,128], index: 2, kind: input, shape index: {}]
  %s3 = inlined_call_operand.hbm [shape: f32[4,8,128], index: 3, kind: output, shape index: {}]
  %s4 = sld [smem:[#allocation0]]
  $region57: #{tpu_custom_call.1} parent=0
    _
  %s6 = ssub.s32 1, %s4
  %s7 = scalar_select 0, %s6, %s4
  $region1: #{tpu_custom_call.1} parent=0
    #allocation2 [shape = 'u8[512]{0}', space=smem, size = 0x200, scoped, tag = 'input window, operand 0, single buffered']
    #allocation3 [shape = 's32[2]{0}', space=sflag, size = 0x8, scoped, tag = 'scoped memory for tpu_custom_call.1']
    #allocation4 [shape = 's32[2]{0}', space=sflag, size = 0x8, scoped, tag = 'scoped memory for tpu_custom_call.1']
    #allocation5 [shape = 's32[2]{0}', space=sflag, size = 0x8, scoped, tag = 'scoped memory for tpu_custom_call.1']
    #allocation6 [shape = 's32[2]{0}', space=sflag, size = 0x8, scoped, tag = 'scoped memory for tpu_custom_call.1']
    #allocation7 [shape = 'u8[512]{0}', space=smem, size = 0x200, scoped, tag = 'input window, operand 1, single buffered']
    #allocation8 [shape = 'u8[8192]{0}', space=vmem, size = 0x2000, scoped, tag = 'input window, operand 2']
    #allocation9 [shape = 'u8[8192]{0}', space=vmem, size = 0x2000, scoped, tag = 'output window, operand 0']
    %8 = vsyncpa [#allocation5], 0
    %9 = vsyncpa [#allocation6], 0
    %10 = vsyncpa [#allocation3], 0
    %s11 = scalar_lea.sflag [#allocation3], 1
    %12 = vsyncpa %s11, 0
    %13 = vsyncpa [#allocation4], 0
    %s14 = scalar_lea.sflag [#allocation4], 1
    %15 = vsyncpa %s14, 0
    loop: start=0, step=1, limit=6
    $region2: #{tpu_custom_call.1} parent=1 // loop_pre_header
      _
    $region3: #{tpu_custom_call.1} parent=1 // loop_header
      %s17 = sphi 0, %s21
      %p18 = scmp.ge.s32.totalorder %s17, 6
      %s24 = sphi 0, %s36
      %s25 = sphi 0, %s32
      %s26 = sphi 0, %s24
      %s27 = sphi 0, %s25
      %s28 = sphi 0, %s26
      %s29 = sphi 0, %s27
      %s37 = sphi 0, %s37
      %s39 = sphi 0, %s37
      %s40 = sphi 0, %s39
      %s54 = sphi 0, %s40
      %s58 = sphi 0, %s58
      %s60 = sphi 0, %s58
      %s61 = sphi 0, %s60
      %s75 = sphi 0, %s61
      %s83 = sphi 0, %s85
      %s86 = sphi 0, %s83
      %s87 = sphi 0, %s86
      %s103 = sphi 0, %s87
      %s111 = sphi 0, %s113
      %s114 = sphi 0, %s111
      %s115 = sphi 0, %s114
      %s131 = sphi 0, %s115
    $region4: #{tpu_custom_call.1} parent=1 // loop_header_branch
      %20 = sbr.rel (%p18) target = $region8
    $region5: #{tpu_custom_call.1} parent=1 // loop_body
      %s22 = ssub.s32 %s17, 1
      %s23 = ssub.s32 %s17, 2
      %s30 = sadd.s32 1, %s25
      %p31 = scmp.ge.s32.totalorder %s30, 1
      %s32 = scalar_select %p31, 0, %s30
      %s33 = sadd.s32 1, %s24
      %s34 = scalar_select %p31, %s33, %s24
      %p35 = scmp.ge.s32.totalorder %s34, 4
      %s36 = scalar_select %p35, 0, %s34
      %s38 = sadd.s32 %s37, 1
      %p41 = scmp.eq.s32.totalorder %s17, 3
      %p42 = scmp.ne.s32.totalorder %s37, %s39
      %p43 = scmp.eq.s32.totalorder %s17, 0
      %p44 = por %p42, %p43
      %p45 = scmp.ne.s32.totalorder %s37, %s39
      %p46 = scmp.eq.s32.totalorder %s22, 3
      %p47 = por %p45, %p46
      %p48 = scmp.ne.s32.totalorder %s39, %s40
      %p49 = scmp.eq.s32.totalorder %s22, 0
      %p50 = por %p48, %p49
      %p51 = scmp.ne.s32.totalorder %s39, %s40
      %p52 = scmp.eq.s32.totalorder %s23, 3
      %p53 = por %p51, %p52
      %p55 = scmp.ne.s32.totalorder %s40, %s54
      %p56 = scmp.eq.s32.totalorder %s23, 0
      %p57 = por %p55, %p56
      %s59 = sadd.s32 %s58, 1
      %p62 = scmp.eq.s32.totalorder %s17, 3
      %p63 = scmp.ne.s32.totalorder %s58, %s60
      %p64 = scmp.eq.s32.totalorder %s17, 0
      %p65 = por %p63, %p64
      %p66 = scmp.ne.s32.totalorder %s58, %s60
      %p67 = scmp.eq.s32.totalorder %s22, 3
      %p68 = por %p66, %p67
      %p69 = scmp.ne.s32.totalorder %s60, %s61
      %p70 = scmp.eq.s32.totalorder %s22, 0
      %p71 = por %p69, %p70
      %p72 = scmp.ne.s32.totalorder %s60, %s61
      %p73 = scmp.eq.s32.totalorder %s23, 3
      %p74 = por %p72, %p73
      %p76 = scmp.ne.s32.totalorder %s61, %s75
      %p77 = scmp.eq.s32.totalorder %s23, 0
      %p78 = por %p76, %p77
      %s79 = ssub.s32 %s24, %s36
      %s80 = ssub.s32 %s25, %s32
      %s81 = sor.u32 %s79, %s80
      %p82 = scmp.eq.s32.totalorder %s81, 0
      %s84 = sadd.s32 %s83, 1
      %s85 = scalar_select %p82, %s83, %s84
      %p88 = pneg %p82
      %p89 = scmp.eq.s32.totalorder %s17, 3
      %p90 = por %p88, %p89
      %p91 = scmp.ne.s32.totalorder %s83, %s86
      %p92 = scmp.eq.s32.totalorder %s17, 0
      %p93 = por %p91, %p92
      %p94 = scmp.ne.s32.totalorder %s83, %s86
      %p95 = scmp.eq.s32.totalorder %s22, 3
      %p96 = por %p94, %p95
      %p97 = scmp.ne.s32.totalorder %s86, %s87
      %p98 = scmp.eq.s32.totalorder %s22, 0
      %p99 = por %p97, %p98
      %p100 = scmp.ne.s32.totalorder %s86, %s87
      %p101 = scmp.eq.s32.totalorder %s23, 3
      %p102 = por %p100, %p101
      %p104 = scmp.ne.s32.totalorder %s87, %s103
      %p105 = scmp.eq.s32.totalorder %s23, 0
      %p106 = por %p104, %p105
      %s107 = ssub.s32 %s24, %s36
      %s108 = ssub.s32 %s25, %s32
      %s109 = sor.u32 %s107, %s108
      %p110 = scmp.eq.s32.totalorder %s109, 0
      %s112 = sadd.s32 %s111, 1
      %s113 = scalar_select %p110, %s111, %s112
      %p116 = pneg %p110
      %p117 = scmp.eq.s32.totalorder %s17, 3
      %p118 = por %p116, %p117
      %p119 = scmp.ne.s32.totalorder %s111, %s114
      %p120 = scmp.eq.s32.totalorder %s17, 0
      %p121 = por %p119, %p120
      %p122 = scmp.ne.s32.totalorder %s111, %s114
      %p123 = scmp.eq.s32.totalorder %s22, 3
      %p124 = por %p122, %p123
      %p125 = scmp.ne.s32.totalorder %s114, %s115
      %p126 = scmp.eq.s32.totalorder %s22, 0
      %p127 = por %p125, %p126
      %p128 = scmp.ne.s32.totalorder %s114, %s115
      %p129 = scmp.eq.s32.totalorder %s23, 3
      %p130 = por %p128, %p129
      %p132 = scmp.ne.s32.totalorder %s115, %s131
      %p133 = scmp.eq.s32.totalorder %s23, 0
      %p134 = por %p132, %p133
      %p135 = scmp.le.s32.totalorder 1, %s17
      %p136 = scmp.lt.s32.totalorder %s17, 5
      %p137 = pnand %p135, %p136
      %p138 = pneg %p137
      // Predicated region
      $region9: #{tpu_custom_call.1} parent=5 // pred_check
        _
      $region10: #{tpu_custom_call.1} parent=5 // pred_check_branch
        %140 = sbr.rel (%p137) target = $region12
      $region11: #{tpu_custom_call.1} parent=5 // pred_region
        %s141 = ssub.s32 %s17, 1
        // Predicated region
        $region13: #{tpu_custom_call.1} parent=11 // pred_check
          %p142 = pneg %p50
        $region14: #{tpu_custom_call.1} parent=11 // pred_check_branch
          %144 = sbr.rel (%p142) target = $region16
        $region15: #{tpu_custom_call.1} parent=11 // pred_region
          %s146 = ssub.s32 16, 16
          %147 = vsyncadd [#allocation5], %s146
          %150 = dma.hbm_to_smem %s0, 16, [#allocation2], [#allocation5]
        $region16: #{tpu_custom_call.1} parent=11 // pred_fallthru
          _
        // Predicated region
        $region17: #{tpu_custom_call.1} parent=11 // pred_check
          %p151 = pneg %p71
        $region18: #{tpu_custom_call.1} parent=11 // pred_check_branch
          %153 = sbr.rel (%p151) target = $region20
        $region19: #{tpu_custom_call.1} parent=11 // pred_region
          %s155 = ssub.s32 16, 16
          %156 = vsyncadd [#allocation6], %s155
          %s158 = sshll.u32 %s1, 4
          %s159 = int_to_ptr.vmem [resolvable:$true] %s158
          %161 = dma.vmem_to_smem %s159, 16, [#allocation7], [#allocation6]
        $region20: #{tpu_custom_call.1} parent=11 // pred_fallthru
          _
      $region12: #{tpu_custom_call.1} parent=5 // pred_fallthru
        _
      %p162 = scmp.lt.s32.totalorder %s17, 4
      // Predicated region
      $region21: #{tpu_custom_call.1} parent=5 // pred_check
        %p163 = pneg %p162
      $region22: #{tpu_custom_call.1} parent=5 // pred_check_branch
        %165 = sbr.rel (%p163) target = $region24
      $region23: #{tpu_custom_call.1} parent=5 // pred_region
        // Predicated region
        $region25: #{tpu_custom_call.1} parent=23 // pred_check
          %p166 = pneg %p93
        $region26: #{tpu_custom_call.1} parent=23 // pred_check_branch
          %168 = sbr.rel (%p166) target = $region28
        $region27: #{tpu_custom_call.1} parent=23 // pred_region
          %s169 = sand.u32 %s83, 1
          %s170 = scalar_lea.sflag [#allocation3], %s169
          %s171 = sand.u32 %s83, 1
          %s172 = smul.addr %s171, 8
          %s173 = scalar_lea.vmem [#allocation8], %s172
          %s175 = ssub.s32 128, 128
          %176 = vsyncadd %s170, %s175
          %s177 = sadd.s32 %s25, %s24
          %s178 = smul.addr %s177, 128
          %s179 = scalar_lea.hbm %s2, %s178
          %s181 = sshll.u32 %s173, 4
          %s182 = int_to_ptr.vmem [resolvable:$true] %s181
          %184 = dma.hbm_to_vmem [thread:$0]  %s179, 128, %s182, %s170
        $region28: #{tpu_custom_call.1} parent=23 // pred_fallthru
          _
      $region24: #{tpu_custom_call.1} parent=5 // pred_fallthru
        _
      %p185 = scmp.le.s32.totalorder 1, %s17
      %p186 = scmp.lt.s32.totalorder %s17, 5
      %p187 = pnand %p185, %p186
      %p188 = pneg %p187
      // Predicated region
      $region29: #{tpu_custom_call.1} parent=5 // pred_check
        _
      $region30: #{tpu_custom_call.1} parent=5 // pred_check_branch
        %190 = sbr.rel (%p187) target = $region32
      $region31: #{tpu_custom_call.1} parent=5 // pred_region
        %s191 = ssub.s32 %s17, 1
        // Predicated region
        $region33: #{tpu_custom_call.1} parent=31 // pred_check
          %p192 = pneg %p50
        $region34: #{tpu_custom_call.1} parent=31 // pred_check_branch
          %194 = sbr.rel (%p192) target = $region36
        $region35: #{tpu_custom_call.1} parent=31 // pred_region
          %195 = dma.done [#allocation5], 16
        $region36: #{tpu_custom_call.1} parent=31 // pred_fallthru
          _
        // Predicated region
        $region37: #{tpu_custom_call.1} parent=31 // pred_check
          %p196 = pneg %p71
        $region38: #{tpu_custom_call.1} parent=31 // pred_check_branch
          %198 = sbr.rel (%p196) target = $region40
        $region39: #{tpu_custom_call.1} parent=31 // pred_region
          %199 = dma.done [#allocation6], 16
        $region40: #{tpu_custom_call.1} parent=31 // pred_fallthru
          _
        %s200 = sand.u32 %s86, 1
        %s201 = scalar_lea.sflag [#allocation3], %s200
        %s202 = sand.u32 %s86, 1
        %s203 = smul.addr %s202, 8
        %s204 = scalar_lea.vmem [#allocation8], %s203
        // Predicated region
        $region41: #{tpu_custom_call.1} parent=31 // pred_check
          %p205 = pneg %p99
        $region42: #{tpu_custom_call.1} parent=31 // pred_check_branch
          %207 = sbr.rel (%p205) target = $region44
        $region43: #{tpu_custom_call.1} parent=31 // pred_region
          %208 = dma.done %s201, 128
        $region44: #{tpu_custom_call.1} parent=31 // pred_fallthru
          _
        %209 = sfence
        %p210 = pneg %p50
        %p211 = pneg %p47
        %p212 = pneg %p71
        %p213 = pneg %p68
        %s214 = sand.u32 %s86, 1
        %s215 = scalar_lea.sflag [#allocation3], %s214
        %s216 = sand.u32 %s86, 1
        %s217 = smul.addr %s216, 8
        %s218 = scalar_lea.vmem [#allocation8], %s217
        %p219 = pneg %p99
        %p220 = pneg %p96
        %p221 = pneg %p127
        %p222 = pneg %p124
        %s223 = sand.u32 %s114, 1
        %s224 = scalar_lea.sflag [#allocation4], %s223
        %s225 = sand.u32 %s114, 1
        %s226 = smul.addr %s225, 8
        %s227 = scalar_lea.vmem [#allocation9], %s226
        %s228 = sld [smem:[#allocation2 + %s26]]
        %s229 = sld [smem:[#allocation7 + %s26]]
        %v230 = vld [vmem:[%s204] sm:$0xff]
        %v231 = vstv %s228
        %v232 = vmul.f32 %v230, %v231
        %v233 = vstv %s229
        %v234 = vadd.f32 %v232, %v233
        %235 = vst [vmem:[%s227] sm:$0xff] %v234
        %s236 = sand.u32 %s114, 1
        %s237 = scalar_lea.sflag [#allocation4], %s236
        %s238 = sand.u32 %s114, 1
        %s239 = smul.addr %s238, 8
        %s240 = scalar_lea.vmem [#allocation9], %s239
        // Predicated region
        $region45: #{tpu_custom_call.1} parent=31 // pred_check
          %p241 = pneg %p124
        $region46: #{tpu_custom_call.1} parent=31 // pred_check_branch
          %243 = sbr.rel (%p241) target = $region48
        $region47: #{tpu_custom_call.1} parent=31 // pred_region
          %s245 = ssub.s32 128, 128
          %246 = vsyncadd %s237, %s245
          %s247 = sadd.s32 %s27, %s26
          %s248 = smul.addr %s247, 128
          %s249 = scalar_lea.hbm %s3, %s248
          %s251 = sshll.u32 %s240, 4
          %s252 = int_to_ptr.vmem [resolvable:$true] %s251
          %254 = dma.vmem_to_hbm [thread:$0]  %s252, 128, %s249, %s237
        $region48: #{tpu_custom_call.1} parent=31 // pred_fallthru
          _
      $region32: #{tpu_custom_call.1} parent=5 // pred_fallthru
        _
      %p255 = scmp.le.s32.totalorder 2, %s17
      // Predicated region
      $region49: #{tpu_custom_call.1} parent=5 // pred_check
        %p256 = pneg %p255
      $region50: #{tpu_custom_call.1} parent=5 // pred_check_branch
        %258 = sbr.rel (%p256) target = $region52
      $region51: #{tpu_custom_call.1} parent=5 // pred_region
        %s259 = ssub.s32 %s17, 2
        // Predicated region
        $region53: #{tpu_custom_call.1} parent=51 // pred_check
          %p260 = pneg %p130
        $region54: #{tpu_custom_call.1} parent=51 // pred_check_branch
          %262 = sbr.rel (%p260) target = $region56
        $region55: #{tpu_custom_call.1} parent=51 // pred_region
          %s263 = sand.u32 %s115, 1
          %s264 = scalar_lea.sflag [#allocation4], %s263
          %s265 = sand.u32 %s115, 1
          %s266 = smul.addr %s265, 8
          %s267 = scalar_lea.vmem [#allocation9], %s266
          %268 = dma.done %s264, 128
        $region56: #{tpu_custom_call.1} parent=51 // pred_fallthru
          _
      $region52: #{tpu_custom_call.1} parent=5 // pred_fallthru
        _
    $region6: #{tpu_custom_call.1} parent=1 // loop_footer
      %s21 = sadd.s32 1, %s17
    $region7: #{tpu_custom_call.1} parent=1 // loop_footer_branch
      %16 = sbr.rel target = $region3
    $region8: #{tpu_custom_call.1} parent=1 // loop_exit
      _
    %269 = vsyncpa [#allocation3], 1
    %s270 = scalar_lea.sflag [#allocation3], 1
    %271 = vsyncpa %s270, 1
    %272 = vsyncpa [#allocation4], 1
    %s273 = scalar_lea.sflag [#allocation4], 1
    %274 = vsyncpa %s273, 1
    %275 = vsyncpa [#allocation5], 1
    %s276 = scalar_lea.sflag [#allocation5], 1
    %277 = vsyncpa %s276, 1
    %278 = vsyncpa [#allocation6], 1
    %s279 = scalar_lea.sflag [#allocation6], 1
    %280 = vsyncpa %s279, 1

</llo_original>
